<compile_context>
chip_gen: v6e
topology: v6e:2x2x1
jax: 0.10.0
libtpu: 0.0.40
codegen_flags: <defaults>
</compile_context>

<pallas_src>
import functools

import jax
import jax.numpy as jnp
from jax import lax
from jax.experimental import pallas as pl
from jax.experimental.pallas import tpu as pltpu


def _round_up(x, m):
    return (x + m - 1) // m * m


def _itemsize(a):
    return int(jnp.dtype(a.dtype).itemsize)


def _vmem_capacity_bytes():
    """Physical VMEM per TensorCore (v5e/v6e: 128 MiB, v7x: 64 MiB)."""
    try:
        info = pltpu.get_tpu_info()
        cap = int(getattr(info, "vmem_capacity_bytes"))
        if cap > 0:
            return cap
    except Exception:
        pass
    return 64 << 20  # conservative default (v7x-sized) works everywhere


def _gelu(h, approximate):
    if approximate:
        # tanh form -> transcendental goes to the EUP (separate VLIW slot).
        return jax.nn.gelu(h, approximate=True)
    # Exact erf form: matches PyTorch nn.GELU() default.
    return 0.5 * h * (1.0 + lax.erf(h * jnp.float32(0.7071067811865476)))


# --------------------------------------------------------------------------
# Kernel 1: weight-resident path (single grid axis over row tiles).
# w1/w2 have constant index_maps -> fetched once, resident across row tiles.
# --------------------------------------------------------------------------
def _ffn_resident_kernel(x_ref, gamma_ref, beta_ref, w1_ref, b1_ref, w2_ref,
                         b2_ref, o_ref, *, eps, approximate_gelu):
    x = x_ref[...].astype(jnp.float32)
    mean = jnp.mean(x, axis=-1, keepdims=True)
    var = jnp.mean(jnp.square(x - mean), axis=-1, keepdims=True)
    xn = (x - mean) * lax.rsqrt(var + eps)
    xn = xn * gamma_ref[...].astype(jnp.float32) + beta_ref[...].astype(jnp.float32)

    # Linear(dim -> hidden): bf16 operands, f32 accumulation on the MXU.
    h = jnp.dot(xn.astype(w1_ref.dtype), w1_ref[...],
                preferred_element_type=jnp.float32)
    h = h + b1_ref[...].astype(jnp.float32)
    h = _gelu(h, approximate_gelu)
    # Dropout(p=0.0) is the identity; skipped.

    # Linear(hidden -> dim).
    y = jnp.dot(h.astype(w2_ref.dtype), w2_ref[...],
                preferred_element_type=jnp.float32)
    y = y + b2_ref[...].astype(jnp.float32)
    o_ref[...] = y.astype(o_ref.dtype)


# --------------------------------------------------------------------------
# Kernel 2: streamed path (grid = (row tiles, hidden tiles)), resident f32
# accumulator over the hidden axis, LayerNorm cached per row tile.
# --------------------------------------------------------------------------
def _ffn_streamed_kernel(x_ref, gamma_ref, beta_ref, w1_ref, b1_ref, w2_ref,
                         b2_ref, o_ref, xn_ref, acc_ref, *, eps,
                         approximate_gelu):
    hj = pl.program_id(1)
    n_h = pl.num_programs(1)

    @pl.when(hj == 0)
    def _():
        x = x_ref[...].astype(jnp.float32)
        mean = jnp.mean(x, axis=-1, keepdims=True)
        var = jnp.mean(jnp.square(x - mean), axis=-1, keepdims=True)
        xn = (x - mean) * lax.rsqrt(var + eps)
        xn = xn * gamma_ref[...].astype(jnp.float32) + beta_ref[...].astype(jnp.float32)
        xn_ref[...] = xn.astype(xn_ref.dtype)  # bf16 cache, reused across H tiles
        acc_ref[...] = jnp.zeros_like(acc_ref)

    h = jnp.dot(xn_ref[...], w1_ref[...], preferred_element_type=jnp.float32)
    h = h + b1_ref[...].astype(jnp.float32)
    h = _gelu(h, approximate_gelu)

    acc_ref[...] += jnp.dot(h.astype(w2_ref.dtype), w2_ref[...],
                            preferred_element_type=jnp.float32)

    @pl.when(hj == n_h - 1)
    def _():
        y = acc_ref[...] + b2_ref[...].astype(jnp.float32)
        o_ref[...] = y.astype(o_ref.dtype)


# --------------------------------------------------------------------------
# VMEM footprint estimates (double-buffered inputs/outputs counted 2x).
# --------------------------------------------------------------------------
def _resident_vmem_bytes(tm, D, H, act_bytes=4, w_bytes=2):
    weights = 2 * (D * H + H * D) * w_bytes
    acts = 2 * tm * D * act_bytes * 2                 # x in + out
    small = 2 * (8 * D * 3 + 8 * H) * 4               # gamma/beta/b2 + b1 (padded)
    return weights + acts + small


def _streamed_vmem_bytes(tm, th, D, H, act_bytes=4, w_bytes=2):
    weights = 2 * (D * th + th * D) * w_bytes
    acts = 2 * tm * D * act_bytes * 2
    scratch = tm * D * (w_bytes + 4)                  # xn cache (bf16) + f32 acc
    small = 2 * (8 * D * 3 + 8 * th) * 4
    return weights + acts + scratch + small


def feed_forward(x, params, *, row_tile=None, hidden_tile=None, eps=1e-5,
                 matmul_dtype=jnp.bfloat16, approximate_gelu=False):
    """x: (B, N, D) -> (B, N, D). Matmuls run with bf16 operands / f32 accum."""
    gamma, beta, w1, b1, w2, b2 = params
    B, N, D = x.shape
    H = w1.shape[1]
    assert D % 128 == 0 and H % 128 == 0, "dim / hidden_dim must be multiples of 128"

    rows = B * N
    rows8 = _round_up(rows, 8)

    # --- per-chip VMEM budget ------------------------------------------------
    phys_vmem = _vmem_capacity_bytes()
    budget = min(phys_vmem // 2, 48 << 20)   # ~32 MiB on v7x, ~48 MiB on v5e/v6e

    # --- tile selection -------------------------------------------------------
    resident = False
    tm = th = None

    try_resident = hidden_tile is None or hidden_tile >= H
    if try_resident:
        if row_tile is not None:
            cand = [_round_up(min(row_tile, rows8), 8)]
        else:
            cand = [c for c in (512, 256, 128, 64, 32, 16, 8) if c <= rows8] or [rows8]
        for c in cand:
            if _resident_vmem_bytes(c, D, H) <= budget:
                resident, tm, th = True, c, H
                break

    if not resident:
        th = min(hidden_tile or 512, H)
        th = max(128, th - th % 128)
        while th > 128 and H % th:
            th -= 128
        if H % th:
            th = 128
        if row_tile is not None:
            cand = [_round_up(min(row_tile, rows8), 8)]
        else:
            cand = [c for c in (768, 512, 384, 256, 128, 64, 32, 16, 8)
                    if c <= rows8] or [rows8]
        tm = None
        for c in cand:
            if _streamed_vmem_bytes(c, th, D, H) <= budget:
                tm = c
                break
        if tm is None:
            tm = cand[-1]

    rows_p = _round_up(rows, tm)
    n_row_tiles = rows_p // tm

    # --- input prep -----------------------------------------------------------
    x2 = x.reshape(rows, D)
    if rows_p != rows:
        x2 = jnp.pad(x2, ((0, rows_p - rows), (0, 0)))

    # Weight cast is a no-op if params were prepared once via prepare_params().
    w1c = w1 if w1.dtype == matmul_dtype else w1.astype(matmul_dtype)
    w2c = w2 if w2.dtype == matmul_dtype else w2.astype(matmul_dtype)

    # --- cost estimate (weights re-streamed per row tile in streamed path) ----
    weight_bytes = w1c.size * _itemsize(w1c) + w2c.size * _itemsize(w2c)
    weight_traffic = weight_bytes * (1 if resident else n_row_tiles)
    small_bytes = (gamma.size + beta.size + b1.size + b2.size) * 4
    cost = pl.CostEstimate(
        flops=int(2 * 2 * rows_p * D * H),
        transcendentals=int(rows_p * H + rows_p),
        bytes_accessed=int(rows_p * D * _itemsize(x2)        # activations in
                           + rows_p * D * _itemsize(x)       # activations out
                           + weight_traffic + small_bytes),
    )

    est_vmem = (_resident_vmem_bytes(tm, D, H) if resident
                else _streamed_vmem_bytes(tm, th, D, H))
    vmem_limit = int(min(phys_vmem - (8 << 20),
                         max(est_vmem + (16 << 20), 32 << 20)))

    if resident:
        grid = (n_row_tiles,)
        kernel = functools.partial(_ffn_resident_kernel, eps=eps,
                                   approximate_gelu=approximate_gelu)
        in_specs = [
            pl.BlockSpec((tm, D), lambda i: (i, 0)),   # x rows
            pl.BlockSpec((1, D), lambda i: (0, 0)),    # gamma
            pl.BlockSpec((1, D), lambda i: (0, 0)),    # beta
            pl.BlockSpec((D, H), lambda i: (0, 0)),    # w1 (resident)
            pl.BlockSpec((1, H), lambda i: (0, 0)),    # b1
            pl.BlockSpec((H, D), lambda i: (0, 0)),    # w2 (resident)
            pl.BlockSpec((1, D), lambda i: (0, 0)),    # b2
        ]
        out_specs = pl.BlockSpec((tm, D), lambda i: (i, 0))
        scratch_shapes = []
        dim_sem = ("parallel",)
    else:
        grid = (n_row_tiles, H // th)
        kernel = functools.partial(_ffn_streamed_kernel, eps=eps,
                                   approximate_gelu=approximate_gelu)
        in_specs = [
            pl.BlockSpec((tm, D), lambda i, j: (i, 0)),   # x rows
            pl.BlockSpec((1, D), lambda i, j: (0, 0)),    # gamma
            pl.BlockSpec((1, D), lambda i, j: (0, 0)),    # beta
            pl.BlockSpec((D, th), lambda i, j: (0, j)),   # w1 (in, hidden-tile)
            pl.BlockSpec((1, th), lambda i, j: (0, j)),   # b1 (hidden-tile)
            pl.BlockSpec((th, D), lambda i, j: (j, 0)),   # w2 (hidden-tile, out)
            pl.BlockSpec((1, D), lambda i, j: (0, 0)),    # b2
        ]
        out_specs = pl.BlockSpec((tm, D), lambda i, j: (i, 0))
        scratch_shapes = [
            pltpu.VMEM((tm, D), matmul_dtype),   # cached LayerNorm output
            pltpu.VMEM((tm, D), jnp.float32),    # f32 output accumulator
        ]
        dim_sem = ("parallel", "arbitrary")

    out = pl.pallas_call(
        kernel,
        out_shape=jax.ShapeDtypeStruct((rows_p, D), x.dtype),
        grid_spec=pltpu.PrefetchScalarGridSpec(
            num_scalar_prefetch=0,
            grid=grid,
            in_specs=in_specs,
            out_specs=out_specs,
            scratch_shapes=scratch_shapes,
        ),
        compiler_params=pltpu.CompilerParams(
            dimension_semantics=dim_sem,
            vmem_limit_bytes=vmem_limit),
        cost_estimate=cost,
    )(x2, gamma, beta, w1c, b1, w2c, b2)

    if rows_p != rows:
        out = out[:rows]
    return out.reshape(B, N, D)


def init_params(key, dim, hidden_dim, dtype=jnp.float32):
    k1, k2, k3, k4 = jax.random.split(key, 4)
    # LayerNorm: weight=1, bias=0 (PyTorch default init).
    gamma = jnp.ones((1, dim), dtype)
    beta = jnp.zeros((1, dim), dtype)
    # Linear layers pre-transposed to (in, out) so both MXU dots are row-major.
    bound1 = 1.0 / float(dim) ** 0.5
    w1 = jax.random.uniform(k1, (dim, hidden_dim), dtype, -bound1, bound1)
    b1 = jax.random.uniform(k2, (1, hidden_dim), dtype, -bound1, bound1)
    bound2 = 1.0 / float(hidden_dim) ** 0.5
    w2 = jax.random.uniform(k3, (hidden_dim, dim), dtype, -bound2, bound2)
    b2 = jax.random.uniform(k4, (1, dim), dtype, -bound2, bound2)
    return gamma, beta, w1, b1, w2, b2


def prepare_params(params, matmul_dtype=jnp.bfloat16):
    """One-time parameter prep: cast the matmul weights to bf16 so the per-call
    f32->bf16 convert (and its HBM traffic) is hoisted out of the hot path."""
    gamma, beta, w1, b1, w2, b2 = params
    return (gamma, beta, w1.astype(matmul_dtype), b1, w2.astype(matmul_dtype), b2)


def _reference(x, params, eps=1e-5, matmul_dtype=jnp.bfloat16):
    """Pure-JAX reference emulating the same bf16-operand / f32-accum matmuls.
    Expect ~1e-3 deviation vs. PyTorch's full-f32 matmul path."""
    gamma, beta, w1, b1, w2, b2 = params
    xf = x.astype(jnp.float32)
    mean = jnp.mean(xf, -1, keepdims=True)
    var = jnp.mean(jnp.square(xf - mean), -1, keepdims=True)
    xn = (xf - mean) * lax.rsqrt(var + eps) * gamma[0].astype(jnp.float32) \
        + beta[0].astype(jnp.float32)
    h = jnp.dot(xn.astype(matmul_dtype), w1.astype(matmul_dtype),
                preferred_element_type=jnp.float32) + b1[0].astype(jnp.float32)
    h = 0.5 * h * (1.0 + lax.erf(h * jnp.float32(0.7071067811865476)))
    y = jnp.dot(h.astype(matmul_dtype), w2.astype(matmul_dtype),
                preferred_element_type=jnp.float32) + b2[0].astype(jnp.float32)
    return y.astype(x.dtype)


if __name__ == "__main__":
    # Small but lane-dense shapes: dim / hidden_dim are multiples of 128.
    B, N, D, H = 2, 8, 128, 256   # batch, tokens, dim, hidden_dim

    key = jax.random.PRNGKey(0)
    kx, kp = jax.random.split(key)
    x = jax.random.normal(kx, (B, N, D), jnp.float32)
    params = init_params(kp, D, H)
    prepared = prepare_params(params)   # one-time f32 -> bf16 weight cast

    # 1) weight-resident fast path (default tile selection).
    y_res = jax.block_until_ready(feed_forward(x, prepared))
    # 2) streamed / hidden-tiled fallback path (exercises the accumulator).
    y_str = jax.block_until_ready(feed_forward(x, prepared, hidden_tile=128))

    y_ref = _reference(x, params)
    for name, y in (("resident", y_res), ("streamed", y_str)):
        assert y.shape == (B, N, D)
        max_err = float(jnp.max(jnp.abs(y - y_ref)))
        assert jnp.allclose(y, y_ref, atol=2e-3, rtol=2e-3), (
            f"{name} path mismatch vs reference (max abs err {max_err})")

    print("KERNEL_OK")
</pallas_src>

<mosaic_0001>
module attributes {stable_mosaic.version = 11 : i64} {
  func.func @_ffn_resident_kernel(%arg0: i32, %arg1: memref<16x128xf32, #tpu.memory_space<vmem>>, %arg2: memref<1x128xf32, #tpu.memory_space<vmem>>, %arg3: memref<1x128xf32, #tpu.memory_space<vmem>>, %arg4: memref<128x256xbf16, #tpu.memory_space<vmem>>, %arg5: memref<1x256xf32, #tpu.memory_space<vmem>>, %arg6: memref<256x128xbf16, #tpu.memory_space<vmem>>, %arg7: memref<1x128xf32, #tpu.memory_space<vmem>>, %arg8: memref<16x128xf32, #tpu.memory_space<vmem>>) attributes {dimension_semantics = [#tpu.dimension_semantics<parallel>], iteration_bounds = array<i64: 1>, scalar_prefetch = 0 : i64, scratch_operands = 0 : i64, tpu.core_type = #tpu.core_type<tc>, window_params = [{transform_indices = @transform_0, window_bounds = array<i64: 16, 128>}, {pipeline_mode = #tpu.pipeline_mode<synchronous>, transform_indices = @transform_1, window_bounds = array<i64: 1, 128>}, {pipeline_mode = #tpu.pipeline_mode<synchronous>, transform_indices = @transform_2, window_bounds = array<i64: 1, 128>}, {pipeline_mode = #tpu.pipeline_mode<synchronous>, transform_indices = @transform_3, window_bounds = array<i64: 128, 256>}, {pipeline_mode = #tpu.pipeline_mode<synchronous>, transform_indices = @transform_4, window_bounds = array<i64: 1, 256>}, {pipeline_mode = #tpu.pipeline_mode<synchronous>, transform_indices = @transform_5, window_bounds = array<i64: 256, 128>}, {pipeline_mode = #tpu.pipeline_mode<synchronous>, transform_indices = @transform_6, window_bounds = array<i64: 1, 128>}, {transform_indices = @transform_7, window_bounds = array<i64: 16, 128>}]} {
    %c0 = arith.constant 0 : index
    %c0_0 = arith.constant 0 : index
    %0 = vector.load %arg1[%c0, %c0_0] : memref<16x128xf32, #tpu.memory_space<vmem>>, vector<16x128xf32>
    %cst = arith.constant dense<0.000000e+00> : vector<16xf32>
    %1 = vector.multi_reduction <add>, %0, %cst [1] : vector<16x128xf32> to vector<16xf32>
    %2 = vector.shape_cast %1 : vector<16xf32> to vector<16x1xf32>
    %cst_1 = arith.constant 1.280000e+02 : f32
    %3 = vector.broadcast %cst_1 : f32 to vector<16x1xf32>
    %4 = arith.divf %2, %3 : vector<16x1xf32>
    %5 = vector.broadcast %4 : vector<16x1xf32> to vector<16x128xf32>
    %6 = arith.subf %0, %5 : vector<16x128xf32>
    %7 = arith.mulf %6, %6 : vector<16x128xf32>
    %cst_2 = arith.constant dense<0.000000e+00> : vector<16xf32>
    %8 = vector.multi_reduction <add>, %7, %cst_2 [1] : vector<16x128xf32> to vector<16xf32>
    %9 = vector.shape_cast %8 : vector<16xf32> to vector<16x1xf32>
    %cst_3 = arith.constant 1.280000e+02 : f32
    %10 = vector.broadcast %cst_3 : f32 to vector<16x1xf32>
    %11 = arith.divf %9, %10 : vector<16x1xf32>
    %12 = vector.broadcast %4 : vector<16x1xf32> to vector<16x128xf32>
    %13 = arith.subf %0, %12 : vector<16x128xf32>
    %cst_4 = arith.constant 9.99999974E-6 : f32
    %14 = vector.broadcast %cst_4 : f32 to vector<16x1xf32>
    %15 = arith.addf %11, %14 : vector<16x1xf32>
    %16 = math.rsqrt %15 : vector<16x1xf32>
    %17 = vector.broadcast %16 : vector<16x1xf32> to vector<16x128xf32>
    %18 = arith.mulf %13, %17 : vector<16x128xf32>
    %c0_5 = arith.constant 0 : index
    %c0_6 = arith.constant 0 : index
    %19 = vector.load %arg2[%c0_5, %c0_6] : memref<1x128xf32, #tpu.memory_space<vmem>>, vector<1x128xf32>
    %20 = vector.broadcast %19 : vector<1x128xf32> to vector<16x128xf32>
    %21 = arith.mulf %18, %20 : vector<16x128xf32>
    %c0_7 = arith.constant 0 : index
    %c0_8 = arith.constant 0 : index
    %22 = vector.load %arg3[%c0_7, %c0_8] : memref<1x128xf32, #tpu.memory_space<vmem>>, vector<1x128xf32>
    %23 = vector.broadcast %22 : vector<1x128xf32> to vector<16x128xf32>
    %24 = arith.addf %21, %23 : vector<16x128xf32>
    %25 = arith.truncf %24 : vector<16x128xf32> to vector<16x128xbf16>
    %c0_9 = arith.constant 0 : index
    %c0_10 = arith.constant 0 : index
    %26 = vector.load %arg4[%c0_9, %c0_10] : memref<128x256xbf16, #tpu.memory_space<vmem>>, vector<128x256xbf16>
    %cst_11 = arith.constant dense<0.000000e+00> : vector<16x256xf32>
    %27 = tpu.matmul %25, %26, %cst_11 {dimension_numbers = #tpu.dot_dimension_numbers<[1], [0], [0], [1], [0, 0, 1, 1], [], []>} : vector<16x128xbf16>, vector<128x256xbf16>, vector<16x256xf32> -> vector<16x256xf32>
    %c0_12 = arith.constant 0 : index
    %c0_13 = arith.constant 0 : index
    %28 = vector.load %arg5[%c0_12, %c0_13] : memref<1x256xf32, #tpu.memory_space<vmem>>, vector<1x256xf32>
    %29 = vector.broadcast %28 : vector<1x256xf32> to vector<16x256xf32>
    %30 = arith.addf %27, %29 : vector<16x256xf32>
    %cst_14 = arith.constant 5.000000e-01 : f32
    %31 = vector.broadcast %cst_14 : f32 to vector<16x256xf32>
    %32 = arith.mulf %31, %30 : vector<16x256xf32>
    %cst_15 = arith.constant 0.707106769 : f32
    %33 = vector.broadcast %cst_15 : f32 to vector<16x256xf32>
    %34 = arith.mulf %30, %33 : vector<16x256xf32>
    %35 = math.erf %34 : vector<16x256xf32>
    %cst_16 = arith.constant 1.000000e+00 : f32
    %36 = vector.broadcast %cst_16 : f32 to vector<16x256xf32>
    %37 = arith.addf %36, %35 : vector<16x256xf32>
    %38 = arith.mulf %32, %37 : vector<16x256xf32>
    %39 = arith.truncf %38 : vector<16x256xf32> to vector<16x256xbf16>
    %c0_17 = arith.constant 0 : index
    %c0_18 = arith.constant 0 : index
    %40 = vector.load %arg6[%c0_17, %c0_18] : memref<256x128xbf16, #tpu.memory_space<vmem>>, vector<256x128xbf16>
    %cst_19 = arith.constant dense<0.000000e+00> : vector<16x128xf32>
    %41 = tpu.matmul %39, %40, %cst_19 {dimension_numbers = #tpu.dot_dimension_numbers<[1], [0], [0], [1], [0, 0, 1, 1], [], []>} : vector<16x256xbf16>, vector<256x128xbf16>, vector<16x128xf32> -> vector<16x128xf32>
    %c0_20 = arith.constant 0 : index
    %c0_21 = arith.constant 0 : index
    %42 = vector.load %arg7[%c0_20, %c0_21] : memref<1x128xf32, #tpu.memory_space<vmem>>, vector<1x128xf32>
    %43 = vector.broadcast %42 : vector<1x128xf32> to vector<16x128xf32>
    %44 = arith.addf %41, %43 : vector<16x128xf32>
    %c0_22 = arith.constant 0 : index
    %c0_23 = arith.constant 0 : index
    %45 = vector.load %arg8[%c0_22, %c0_23] : memref<16x128xf32, #tpu.memory_space<vmem>>, vector<16x128xf32>
    tpu.vector_store %arg8[%c0_22, %c0_23], %44 {strides = array<i32>} : memref<16x128xf32, #tpu.memory_space<vmem>>, vector<16x128xf32>,
    return
  }
  func.func @transform_0(%arg0: i32) -> (i32, i32) {
    %c0_i32 = arith.constant 0 : i32
    %c0_i32_0 = arith.constant 0 : i32
    return %arg0, %c0_i32 : i32, i32
  }
  func.func @transform_1(%arg0: i32) -> (i32, i32) {
    %c0_i32 = arith.constant 0 : i32
    %c0_i32_0 = arith.constant 0 : i32
    %c0_i32_1 = arith.constant 0 : i32
    return %c0_i32, %c0_i32_0 : i32, i32
  }
  func.func @transform_2(%arg0: i32) -> (i32, i32) {
    %c0_i32 = arith.constant 0 : i32
    %c0_i32_0 = arith.constant 0 : i32
    %c0_i32_1 = arith.constant 0 : i32
    return %c0_i32, %c0_i32_0 : i32, i32
  }
  func.func @transform_3(%arg0: i32) -> (i32, i32) {
    %c0_i32 = arith.constant 0 : i32
    %c0_i32_0 = arith.constant 0 : i32
    %c0_i32_1 = arith.constant 0 : i32
    return %c0_i32, %c0_i32_0 : i32, i32
  }
  func.func @transform_4(%arg0: i32) -> (i32, i32) {
    %c0_i32 = arith.constant 0 : i32
    %c0_i32_0 = arith.constant 0 : i32
    %c0_i32_1 = arith.constant 0 : i32
    return %c0_i32, %c0_i32_0 : i32, i32
  }
  func.func @transform_5(%arg0: i32) -> (i32, i32) {
    %c0_i32 = arith.constant 0 : i32
    %c0_i32_0 = arith.constant 0 : i32
    %c0_i32_1 = arith.constant 0 : i32
    return %c0_i32, %c0_i32_0 : i32, i32
  }
  func.func @transform_6(%arg0: i32) -> (i32, i32) {
    %c0_i32 = arith.constant 0 : i32
    %c0_i32_0 = arith.constant 0 : i32
    %c0_i32_1 = arith.constant 0 : i32
    return %c0_i32, %c0_i32_0 : i32, i32
  }
  func.func @transform_7(%arg0: i32) -> (i32, i32) {
    %c0_i32 = arith.constant 0 : i32
    %c0_i32_0 = arith.constant 0 : i32
    return %arg0, %c0_i32 : i32, i32
  }
}

</mosaic_0001>

<llo_original>
// kernel: tpu_custom_call.1
$region0: #{tpu_custom_call.1}
  #allocation0 [shape = 'u32[]', space=smem, size = 0x4, offset = 0x4, fixed_abs, tag = 'smem constant byte address 0x4 - core index']
  #allocation1 [shape = 'u32[144,128]{1,0:T(1,128)}', space=vmem, size = 0x12000, scoped, tag = 'internal scratch']
  %s0 = inlined_call_operand.hbm [shape: f32[16,128], index: 0, kind: input, shape index: {}]
  %s1 = inlined_call_operand.vmem [shape: f32[1,128], index: 1, kind: input, shape index: {}]
  %s2 = inlined_call_operand.hbm [shape: f32[1,128], index: 2, kind: input, shape index: {}]
  %s3 = inlined_call_operand.hbm [shape: bf16[128,256], index: 3, kind: input, shape index: {}]
  %s4 = inlined_call_operand.vmem [shape: f32[1,256], index: 4, kind: input, shape index: {}]
  %s5 = inlined_call_operand.hbm [shape: bf16[256,128], index: 5, kind: input, shape index: {}]
  %s6 = inlined_call_operand.vmem [shape: f32[1,128], index: 6, kind: input, shape index: {}]
  %s7 = inlined_call_operand.hbm [shape: f32[16,128], index: 7, kind: output, shape index: {}]
  %s8 = sld [smem:[#allocation0]]
  $region54: #{tpu_custom_call.1} parent=0
    _
  %s10 = ssub.s32 1, %s8
  %s11 = scalar_select 0, %s10, %s8
  $region1: #{tpu_custom_call.1} parent=0
    #allocation2 [shape = 'u8[8192]{0}', space=vmem, size = 0x2000, scoped, tag = 'input window, operand 0, single buffered']
    #allocation3 [shape = 's32[1]{0}', space=sflag, size = 0x4, scoped, tag = 'scoped memory for tpu_custom_call.1']
    #allocation4 [shape = 's32[1]{0}', space=sflag, size = 0x4, scoped, tag = 'scoped memory for tpu_custom_call.1']
    #allocation5 [shape = 'u8[512]{0}', space=vmem, size = 0x400, scoped, tag = 'input window, operand 2, single buffered']
    #allocation6 [shape = 's32[1]{0}', space=sflag, size = 0x4, scoped, tag = 'scoped memory for tpu_custom_call.1']
    #allocation7 [shape = 'u8[65536]{0}', space=vmem, size = 0x10000, scoped, tag = 'input window, operand 3, single buffered']
    #allocation8 [shape = 'u8[65536]{0}', space=vmem, size = 0x10000, scoped, tag = 'input window, operand 5, single buffered']
    #allocation9 [shape = 's32[1]{0}', space=sflag, size = 0x4, scoped, tag = 'scoped memory for tpu_custom_call.1']
    #allocation10 [shape = 'u8[8192]{0}', space=vmem, size = 0x2000, scoped, tag = 'output window, operand 0, single buffered']
    %12 = vsyncpa [#allocation3], 0
    %13 = vsyncpa [#allocation6], 0
    %14 = vsyncpa [#allocation9], 0
    %15 = vsyncpa [#allocation4], 0
    // Predicated region
    $region2: #{tpu_custom_call.1} parent=1 // pred_check
      _
    $region3: #{tpu_custom_call.1} parent=1 // pred_check_branch
      %17 = sbr.rel (0) target = $region5
    $region4: #{tpu_custom_call.1} parent=1 // pred_region
      %s19 = ssub.s32 256, 256
      %20 = vsyncadd [#allocation3], %s19
      %s21 = sshll.u32 [#allocation2], 4
      %s22 = int_to_ptr.vmem [resolvable:$true] %s21
      %27 = dma.hbm_to_vmem [thread:$0]  %s0, 256, %s22, [#allocation3], 128, 128, 8
    $region5: #{tpu_custom_call.1} parent=1 // pred_fallthru
      _
    // Predicated region
    $region6: #{tpu_custom_call.1} parent=1 // pred_check
      _
    $region7: #{tpu_custom_call.1} parent=1 // pred_check_branch
      %29 = sbr.rel (0) target = $region9
    $region8: #{tpu_custom_call.1} parent=1 // pred_region
      _
    $region9: #{tpu_custom_call.1} parent=1 // pred_fallthru
      _
    // Predicated region
    $region10: #{tpu_custom_call.1} parent=1 // pred_check
      _
    $region11: #{tpu_custom_call.1} parent=1 // pred_check_branch
      %31 = sbr.rel (0) target = $region13
    $region12: #{tpu_custom_call.1} parent=1 // pred_region
      %s33 = ssub.s32 16, 16
      %34 = vsyncadd [#allocation6], %s33
      %s36 = sshll.u32 [#allocation5], 4
      %s37 = int_to_ptr.vmem [resolvable:$true] %s36
      %39 = dma.hbm_to_vmem [thread:$0]  %s2, 16, %s37, [#allocation6]
    $region13: #{tpu_custom_call.1} parent=1 // pred_fallthru
      _
    // Predicated region
    $region14: #{tpu_custom_call.1} parent=1 // pred_check
      _
    $region15: #{tpu_custom_call.1} parent=1 // pred_check_branch
      %41 = sbr.rel (0) target = $region17
    $region16: #{tpu_custom_call.1} parent=1 // pred_region
      %s43 = ssub.s32 2048, 2048
      %44 = vsyncadd [#allocation6], %s43
      %s45 = sshll.u32 [#allocation7], 4
      %s46 = int_to_ptr.vmem [resolvable:$true] %s45
      %51 = dma.hbm_to_vmem [thread:$0]  %s3, 2048, %s46, [#allocation6], 128, 128, 8
    $region17: #{tpu_custom_call.1} parent=1 // pred_fallthru
      _
    // Predicated region
    $region18: #{tpu_custom_call.1} parent=1 // pred_check
      _
    $region19: #{tpu_custom_call.1} parent=1 // pred_check_branch
      %53 = sbr.rel (0) target = $region21
    $region20: #{tpu_custom_call.1} parent=1 // pred_region
      _
    $region21: #{tpu_custom_call.1} parent=1 // pred_fallthru
      _
    // Predicated region
    $region22: #{tpu_custom_call.1} parent=1 // pred_check
      _
    $region23: #{tpu_custom_call.1} parent=1 // pred_check_branch
      %55 = sbr.rel (0) target = $region25
    $region24: #{tpu_custom_call.1} parent=1 // pred_region
      %s57 = ssub.s32 2048, 2048
      %58 = vsyncadd [#allocation9], %s57
      %s59 = sshll.u32 [#allocation8], 4
      %s60 = int_to_ptr.vmem [resolvable:$true] %s59
      %65 = dma.hbm_to_vmem [thread:$0]  %s5, 2048, %s60, [#allocation9], 64, 64, 4
    $region25: #{tpu_custom_call.1} parent=1 // pred_fallthru
      _
    // Predicated region
    $region26: #{tpu_custom_call.1} parent=1 // pred_check
      _
    $region27: #{tpu_custom_call.1} parent=1 // pred_check_branch
      %67 = sbr.rel (0) target = $region29
    $region28: #{tpu_custom_call.1} parent=1 // pred_region
      _
    $region29: #{tpu_custom_call.1} parent=1 // pred_fallthru
      _
    // Predicated region
    $region30: #{tpu_custom_call.1} parent=1 // pred_check
      _
    $region31: #{tpu_custom_call.1} parent=1 // pred_check_branch
      %69 = sbr.rel (0) target = $region33
    $region32: #{tpu_custom_call.1} parent=1 // pred_region
      %70 = dma.done [#allocation3], 256
    $region33: #{tpu_custom_call.1} parent=1 // pred_fallthru
      _
    // Predicated region
    $region34: #{tpu_custom_call.1} parent=1 // pred_check
      _
    $region35: #{tpu_custom_call.1} parent=1 // pred_check_branch
      %72 = sbr.rel (0) target = $region37
    $region36: #{tpu_custom_call.1} parent=1 // pred_region
      %73 = dma.done [#allocation6], 16
    $region37: #{tpu_custom_call.1} parent=1 // pred_fallthru
      _
    // Predicated region
    $region38: #{tpu_custom_call.1} parent=1 // pred_check
      _
    $region39: #{tpu_custom_call.1} parent=1 // pred_check_branch
      %75 = sbr.rel (0) target = $region41
    $region40: #{tpu_custom_call.1} parent=1 // pred_region
      %76 = dma.done [#allocation6], 2048
    $region41: #{tpu_custom_call.1} parent=1 // pred_fallthru
      _
    // Predicated region
    $region42: #{tpu_custom_call.1} parent=1 // pred_check
      _
    $region43: #{tpu_custom_call.1} parent=1 // pred_check_branch
      %78 = sbr.rel (0) target = $region45
    $region44: #{tpu_custom_call.1} parent=1 // pred_region
      %79 = dma.done [#allocation9], 2048
    $region45: #{tpu_custom_call.1} parent=1 // pred_fallthru
      _
    %v81 = vld [vmem:[#allocation2] sm:$0xff]
    %v82 = vld [vmem:[#allocation2 + $0x8] sm:$0xff]
    %83 = vadd.xlane.f32.xlu0 %v81
    %v84 = vpop.xlane.xlu0 %83
    %85 = vadd.xlane.f32.xlu0 %v82
    %v86 = vpop.xlane.xlu0 %85
    %v87 = vrcp.pop 128.0
    %v88 = vmul.f32 %v84, %v87
    %v89 = vmul.f32 %v86, %v87
    %v90 = vsub.f32 %v81, %v88
    %v91 = vsub.f32 %v82, %v89
    %v92 = vmul.f32 %v90, %v90
    %v93 = vmul.f32 %v91, %v91
    %94 = vadd.xlane.f32.xlu0 %v92
    %v95 = vpop.xlane.xlu0 %94
    %96 = vadd.xlane.f32.xlu0 %v93
    %v97 = vpop.xlane.xlu0 %96
    %v98 = vmul.f32 %v95, %v87
    %v99 = vmul.f32 %v97, %v87
    %v100 = vadd.f32 %v98, 1e-05
    %v101 = vadd.f32 %v99, 1e-05
    %v102 = vrsqrt.pop %v100
    %v103 = vrsqrt.pop %v101
    %v104 = vmul.f32 %v90, %v102
    %v105 = vmul.f32 %v91, %v103
    %v106 = vld [vmem:[%s1] sm:$0x1]
    %v108 = vlaneseq
    %v109 = vshrl.u32 %v108, 7
    %v110 = vsub.s32 0, %v109
    %v111 = vrot.slane %v106, %v110
    %v113 = vmul.f32 %v104, %v111
    %v114 = vmul.f32 %v105, %v111
    %v115 = vld [vmem:[#allocation5] sm:$0x1]
    %v117 = vlaneseq
    %v118 = vshrl.u32 %v117, 7
    %v119 = vsub.s32 0, %v118
    %v120 = vrot.slane %v115, %v119
    %v122 = vadd.f32 %v113, %v120
    %v123 = vadd.f32 %v114, %v120
    %v124 = vpack.c.bf16 %v123, %v122
    %v125 = vld [vmem:[#allocation7] sm:$0xff]
    %v126 = vld [vmem:[#allocation7 + $0x8] sm:$0xff]
    %v127 = vld [vmem:[#allocation7 + $0x10] sm:$0xff]
    %v128 = vld [vmem:[#allocation7 + $0x18] sm:$0xff]
    %v129 = vld [vmem:[#allocation7 + $0x20] sm:$0xff]
    %v130 = vld [vmem:[#allocation7 + $0x28] sm:$0xff]
    %v131 = vld [vmem:[#allocation7 + $0x30] sm:$0xff]
    %v132 = vld [vmem:[#allocation7 + $0x38] sm:$0xff]
    %v133 = vld [vmem:[#allocation7 + $0x40] sm:$0xff]
    %v134 = vld [vmem:[#allocation7 + $0x48] sm:$0xff]
    %v135 = vld [vmem:[#allocation7 + $0x50] sm:$0xff]
    %v136 = vld [vmem:[#allocation7 + $0x58] sm:$0xff]
    %v137 = vld [vmem:[#allocation7 + $0x60] sm:$0xff]
    %v138 = vld [vmem:[#allocation7 + $0x68] sm:$0xff]
    %v139 = vld [vmem:[#allocation7 + $0x70] sm:$0xff]
    %v140 = vld [vmem:[#allocation7 + $0x78] sm:$0xff]
    %v141 = vld [vmem:[%s4] sm:$0x3]
    %v143 = vlaneseq
    %v144 = vshrl.u32 %v143, 7
    %v145 = vsub.s32 0, %v144
    %v146 = vrot.slane %v141, %v145
    %v147 = vlaneseq
    %v148 = vshrl.u32 %v147, 7
    %v149 = vsub.s32 1, %v148
    %v150 = vrot.slane %v141, %v149
    %v169 = vunpack.c.l.b16 %v125
    %v170 = vunpack.c.h.b16 %v125
    %v171 = vunpack.c.l.b16 %v126
    %v172 = vunpack.c.h.b16 %v126
    %v173 = vunpack.c.l.b16 %v127
    %v174 = vunpack.c.h.b16 %v127
    %v175 = vunpack.c.l.b16 %v128
    %v176 = vunpack.c.h.b16 %v128
    %v177 = vunpack.c.l.b16 %v129
    %v178 = vunpack.c.h.b16 %v129
    %v179 = vunpack.c.l.b16 %v130
    %v180 = vunpack.c.h.b16 %v130
    %v181 = vunpack.c.l.b16 %v131
    %v182 = vunpack.c.h.b16 %v131
    %v183 = vunpack.c.l.b16 %v132
    %v184 = vunpack.c.h.b16 %v132
    %v185 = vunpack.c.l.b16 %v133
    %v186 = vunpack.c.h.b16 %v133
    %v187 = vunpack.c.l.b16 %v134
    %v188 = vunpack.c.h.b16 %v134
    %v189 = vunpack.c.l.b16 %v135
    %v190 = vunpack.c.h.b16 %v135
    %v191 = vunpack.c.l.b16 %v136
    %v192 = vunpack.c.h.b16 %v136
    %v193 = vunpack.c.l.b16 %v137
    %v194 = vunpack.c.h.b16 %v137
    %v195 = vunpack.c.l.b16 %v138
    %v196 = vunpack.c.h.b16 %v138
    %v197 = vunpack.c.l.b16 %v139
    %v198 = vunpack.c.h.b16 %v139
    %v199 = vunpack.c.l.b16 %v140
    %v200 = vunpack.c.h.b16 %v140
    %v201 = vpack.c.b16 %v171, %v169
    %v202 = vpack.c.b16 %v172, %v170
    %v203 = vpack.c.b16 %v175, %v173
    %v204 = vpack.c.b16 %v176, %v174
    %v205 = vpack.c.b16 %v179, %v177
    %v206 = vpack.c.b16 %v180, %v178
    %v207 = vpack.c.b16 %v183, %v181
    %v208 = vpack.c.b16 %v184, %v182
    %v209 = vpack.c.b16 %v187, %v185
    %v210 = vpack.c.b16 %v188, %v186
    %v211 = vpack.c.b16 %v191, %v189
    %v212 = vpack.c.b16 %v192, %v190
    %v213 = vpack.c.b16 %v195, %v193
    %v214 = vpack.c.b16 %v196, %v194
    %v215 = vpack.c.b16 %v199, %v197
    %v216 = vpack.c.b16 %v200, %v198
    %233 = vmatprep.subr.bf16.mxu0 %v216
    %234 = vmatpush1.bf16.msra.mxu0 %v215
    %235 = vmatprep.subr.bf16.mxu0 %v214
    %236 = vmatpush1.bf16.msra.mxu0 %v213
    %237 = vmatprep.subr.bf16.mxu0 %v212
    %238 = vmatpush1.bf16.msra.mxu0 %v211
    %239 = vmatprep.subr.bf16.mxu0 %v210
    %240 = vmatpush1.bf16.msra.mxu0 %v209
    %241 = vmatprep.subr.bf16.mxu0 %v208
    %242 = vmatpush1.bf16.msra.mxu0 %v207
    %243 = vmatprep.subr.bf16.mxu0 %v206
    %244 = vmatpush1.bf16.msra.mxu0 %v205
    %245 = vmatprep.subr.bf16.mxu0 %v204
    %246 = vmatpush1.bf16.msra.mxu0 %v203
    %247 = vmatprep.subr.bf16.mxu0 %v202
    %248 = vmatpush1.bf16.msra.mxu0 %v201
    %249 = vmatprep.subr.bf16.mxu0 0
    %250 = vmatpush2.bf16.msra.mxu0 0
    %251 = vmatprep.subr.bf16.mxu0 0
    %252 = vmatpush2.bf16.msra.mxu0 0
    %253 = vmatprep.subr.bf16.mxu0 0
    %254 = vmatpush2.bf16.msra.mxu0 0
    %255 = vmatprep.subr.bf16.mxu0 0
    %256 = vmatpush2.bf16.msra.mxu0 0
    %257 = vmatprep.subr.bf16.mxu0 0
    %258 = vmatpush2.bf16.msra.mxu0 0
    %259 = vmatprep.subr.bf16.mxu0 0
    %260 = vmatpush2.bf16.msra.mxu0 0
    %261 = vmatprep.subr.bf16.mxu0 0
    %262 = vmatpush2.bf16.msra.mxu0 0
    %263 = vmatprep.subr.bf16.mxu0 0
    %264 = vmatpush2.bf16.msra.mxu0 0
    %265 = vmatprep.mubr.bf16.mxu0 0
    %266 = vmatmul.mubr.bf16.gmra.mxu0 %v124
    %v267 = vpop.f32.mrf.mxu0
    %v268 = vadd.f32 %v146, %v267
    %v269 = vpop.f32.mrf.mxu0
    %v270 = vadd.f32 %v150, %v269
    %v271 = vpop.f32.mrf.mxu0
    %v272 = vadd.f32 %v146, %v271
    %v273 = vpop.f32.mrf.mxu0
    %v274 = vadd.f32 %v150, %v273
    %275 = vdwg.mxu0
    %v276 = vmul.f32 %v268, 0.5
    %v277 = vmul.f32 %v270, 0.5
    %v278 = vmul.f32 %v272, 0.5
    %v279 = vmul.f32 %v274, 0.5
    %v280 = vmul.f32 %v268, 0.70710677
    %v281 = vmul.f32 %v270, 0.70710677
    %v282 = vmul.f32 %v272, 0.70710677
    %v283 = vmul.f32 %v274, 0.70710677
    %v284 = verf.f32.pop %v280
    %v285 = verf.f32.pop %v281
    %v286 = verf.f32.pop %v282
    %v287 = verf.f32.pop %v283
    %v288 = vadd.f32 %v284, 1.0
    %v289 = vadd.f32 %v285, 1.0
    %v290 = vadd.f32 %v286, 1.0
    %v291 = vadd.f32 %v287, 1.0
    %v292 = vmul.f32 %v276, %v288
    %v293 = vmul.f32 %v277, %v289
    %v294 = vmul.f32 %v278, %v290
    %v295 = vmul.f32 %v279, %v291
    %v296 = vpack.c.bf16 %v294, %v292
    %v297 = vpack.c.bf16 %v295, %v293
    %v298 = vld [vmem:[#allocation8] sm:$0xf]
    %v299 = vld [vmem:[#allocation8 + $0x4] sm:$0xf]
    %v300 = vld [vmem:[#allocation8 + $0x8] sm:$0xf]
    %v301 = vld [vmem:[#allocation8 + $0xc] sm:$0xf]
    %v302 = vld [vmem:[#allocation8 + $0x10] sm:$0xf]
    %v303 = vld [vmem:[#allocation8 + $0x14] sm:$0xf]
    %v304 = vld [vmem:[#allocation8 + $0x18] sm:$0xf]
    %v305 = vld [vmem:[#allocation8 + $0x1c] sm:$0xf]
    %v306 = vld [vmem:[#allocation8 + $0x20] sm:$0xf]
    %v307 = vld [vmem:[#allocation8 + $0x24] sm:$0xf]
    %v308 = vld [vmem:[#allocation8 + $0x28] sm:$0xf]
    %v309 = vld [vmem:[#allocation8 + $0x2c] sm:$0xf]
    %v310 = vld [vmem:[#allocation8 + $0x30] sm:$0xf]
    %v311 = vld [vmem:[#allocation8 + $0x34] sm:$0xf]
    %v312 = vld [vmem:[#allocation8 + $0x38] sm:$0xf]
    %v313 = vld [vmem:[#allocation8 + $0x3c] sm:$0xf]
    %v314 = vld [vmem:[#allocation8 + $0x40] sm:$0xf]
    %v315 = vld [vmem:[#allocation8 + $0x44] sm:$0xf]
    %v316 = vld [vmem:[#allocation8 + $0x48] sm:$0xf]
    %v317 = vld [vmem:[#allocation8 + $0x4c] sm:$0xf]
    %v318 = vld [vmem:[#allocation8 + $0x50] sm:$0xf]
    %v319 = vld [vmem:[#allocation8 + $0x54] sm:$0xf]
    %v320 = vld [vmem:[#allocation8 + $0x58] sm:$0xf]
    %v321 = vld [vmem:[#allocation8 + $0x5c] sm:$0xf]
    %v322 = vld [vmem:[#allocation8 + $0x60] sm:$0xf]
    %v323 = vld [vmem:[#allocation8 + $0x64] sm:$0xf]
    %v324 = vld [vmem:[#allocation8 + $0x68] sm:$0xf]
    %v325 = vld [vmem:[#allocation8 + $0x6c] sm:$0xf]
    %v326 = vld [vmem:[#allocation8 + $0x70] sm:$0xf]
    %v327 = vld [vmem:[#allocation8 + $0x74] sm:$0xf]
    %v328 = vld [vmem:[#allocation8 + $0x78] sm:$0xf]
    %v329 = vld [vmem:[#allocation8 + $0x7c] sm:$0xf]
    %v330 = vld [vmem:[%s6] sm:$0x1]
    %v332 = vlaneseq
    %v333 = vshrl.u32 %v332, 7
    %v334 = vsub.s32 0, %v333
    %v335 = vrot.slane %v330, %v334
    %v369 = vunpack.c.l.b16 %v298
    %v370 = vunpack.c.l.b16 %v299
    %v371 = vunpack.c.l.b16 %v300
    %v372 = vunpack.c.l.b16 %v301
    %v373 = vunpack.c.l.b16 %v302
    %v374 = vunpack.c.l.b16 %v303
    %v375 = vunpack.c.l.b16 %v304
    %v376 = vunpack.c.l.b16 %v305
    %v377 = vunpack.c.l.b16 %v306
    %v378 = vunpack.c.l.b16 %v307
    %v379 = vunpack.c.l.b16 %v308
    %v380 = vunpack.c.l.b16 %v309
    %v381 = vunpack.c.l.b16 %v310
    %v382 = vunpack.c.l.b16 %v311
    %v383 = vunpack.c.l.b16 %v312
    %v384 = vunpack.c.l.b16 %v313
    %v385 = vunpack.c.l.b16 %v314
    %v386 = vunpack.c.l.b16 %v315
    %v387 = vunpack.c.l.b16 %v316
    %v388 = vunpack.c.l.b16 %v317
    %v389 = vunpack.c.l.b16 %v318
    %v390 = vunpack.c.l.b16 %v319
    %v391 = vunpack.c.l.b16 %v320
    %v392 = vunpack.c.l.b16 %v321
    %v393 = vunpack.c.l.b16 %v322
    %v394 = vunpack.c.l.b16 %v323
    %v395 = vunpack.c.l.b16 %v324
    %v396 = vunpack.c.l.b16 %v325
    %v397 = vunpack.c.l.b16 %v326
    %v398 = vunpack.c.l.b16 %v327
    %v399 = vunpack.c.l.b16 %v328
    %v400 = vunpack.c.l.b16 %v329
    %v401 = vpack.c.b16 %v370, %v369
    %v402 = vpack.c.b16 %v372, %v371
    %v403 = vpack.c.b16 %v374, %v373
    %v404 = vpack.c.b16 %v376, %v375
    %v405 = vpack.c.b16 %v378, %v377
    %v406 = vpack.c.b16 %v380, %v379
    %v407 = vpack.c.b16 %v382, %v381
    %v408 = vpack.c.b16 %v384, %v383
    %v409 = vpack.c.b16 %v386, %v385
    %v410 = vpack.c.b16 %v388, %v387
    %v411 = vpack.c.b16 %v390, %v389
    %v412 = vpack.c.b16 %v392, %v391
    %v413 = vpack.c.b16 %v394, %v393
    %v414 = vpack.c.b16 %v396, %v395
    %v415 = vpack.c.b16 %v398, %v397
    %v416 = vpack.c.b16 %v400, %v399
    %433 = vmatprep.subr.bf16.mxu0 0
    %434 = vmatpush1.bf16.msra.mxu0 %v408
    %435 = vmatprep.subr.bf16.mxu0 0
    %436 = vmatpush1.bf16.msra.mxu0 %v407
    %437 = vmatprep.subr.bf16.mxu0 0
    %438 = vmatpush1.bf16.msra.mxu0 %v406
    %439 = vmatprep.subr.bf16.mxu0 0
    %440 = vmatpush1.bf16.msra.mxu0 %v405
    %441 = vmatprep.subr.bf16.mxu0 0
    %442 = vmatpush1.bf16.msra.mxu0 %v404
    %443 = vmatprep.subr.bf16.mxu0 0
    %444 = vmatpush1.bf16.msra.mxu0 %v403
    %445 = vmatprep.subr.bf16.mxu0 0
    %446 = vmatpush1.bf16.msra.mxu0 %v402
    %447 = vmatprep.subr.bf16.mxu0 0
    %448 = vmatpush1.bf16.msra.mxu0 %v401
    %449 = vmatprep.subr.bf16.mxu0 0
    %450 = vmatpush2.bf16.msra.mxu0 %v416
    %451 = vmatprep.subr.bf16.mxu0 0
    %452 = vmatpush2.bf16.msra.mxu0 %v415
    %453 = vmatprep.subr.bf16.mxu0 0
    %454 = vmatpush2.bf16.msra.mxu0 %v414
    %455 = vmatprep.subr.bf16.mxu0 0
    %456 = vmatpush2.bf16.msra.mxu0 %v413
    %457 = vmatprep.subr.bf16.mxu0 0
    %458 = vmatpush2.bf16.msra.mxu0 %v412
    %459 = vmatprep.subr.bf16.mxu0 0
    %460 = vmatpush2.bf16.msra.mxu0 %v411
    %461 = vmatprep.subr.bf16.mxu0 0
    %462 = vmatpush2.bf16.msra.mxu0 %v410
    %463 = vmatprep.subr.bf16.mxu0 0
    %464 = vmatpush2.bf16.msra.mxu0 %v409
    %465 = vmatprep.mubr.bf16.mxu0 %v297
    %466 = vmatmul.mubr.bf16.gmra.mxu0 %v296
    %v467 = vpop.f32.mrf.mxu0
    %v468 = vadd.f32 %v335, %v467
    %v469 = vpop.f32.mrf.mxu0
    %v470 = vpop.f32.mrf.mxu0
    %v471 = vadd.f32 %v335, %v470
    %v472 = vpop.f32.mrf.mxu0
    %473 = vdwg.mxu0
    %474 = vst [vmem:[#allocation10] sm:$0xff] %v468
    %475 = vst [vmem:[#allocation10 + $0x8] sm:$0xff] %v471
    // Predicated region
    $region46: #{tpu_custom_call.1} parent=1 // pred_check
      _
    $region47: #{tpu_custom_call.1} parent=1 // pred_check_branch
      %477 = sbr.rel (0) target = $region49
    $region48: #{tpu_custom_call.1} parent=1 // pred_region
      %s479 = ssub.s32 256, 256
      %480 = vsyncadd [#allocation4], %s479
      %s481 = sshll.u32 [#allocation10], 4
      %s482 = int_to_ptr.vmem [resolvable:$true] %s481
      %487 = dma.vmem_to_hbm [thread:$0]  %s482, 256, %s7, [#allocation4], 128, 128, 8
    $region49: #{tpu_custom_call.1} parent=1 // pred_fallthru
      _
    // Predicated region
    $region50: #{tpu_custom_call.1} parent=1 // pred_check
      _
    $region51: #{tpu_custom_call.1} parent=1 // pred_check_branch
      %489 = sbr.rel (0) target = $region53
    $region52: #{tpu_custom_call.1} parent=1 // pred_region
      %490 = dma.done [#allocation4], 256
    $region53: #{tpu_custom_call.1} parent=1 // pred_fallthru
      _
    %491 = vsyncpa [#allocation3], 1
    %492 = vsyncpa [#allocation6], 1
    %493 = vsyncpa [#allocation9], 1
    %494 = vsyncpa [#allocation4], 1

</llo_original>
